<compile_context>
chip_gen: v7x
topology: tpu7x:2x2x1
jax: 0.10.0
libtpu: 0.0.40
codegen_flags: <defaults>
</compile_context>

<pallas_src>
import functools

import jax
import jax.numpy as jnp
from jax import lax
from jax.experimental import pallas as pl
from jax.experimental.pallas import tpu as pltpu


# ---------------------------------------------------------------------------
# Kernels
# ---------------------------------------------------------------------------
def _fused_kernel(g_ref, b_ref, x_ref, o_ref, *, hw, m, eps):
    """One whole sample resident: stats + finalize + apply in a single pass."""
    x = x_ref[0].astype(jnp.float32)                      # (C, HWp)
    # Zero padding (HWp > hw) contributes 0 to the raw sum.
    mean = jnp.sum(x) / m
    if hw == x.shape[1]:
        d = x - mean
    else:
        col = lax.broadcasted_iota(jnp.int32, x.shape, 1)
        d = jnp.where(col < hw, x - mean, 0.0)            # centered, pad masked
    var = jnp.sum(d * d) / max(m - 1, 1)                  # unbiased (torch.std)
    inv = 1.0 / (jnp.sqrt(var) + eps)
    scale = g_ref[0].astype(jnp.float32) * inv            # (C, 1)
    beta = b_ref[0].astype(jnp.float32)                   # (C, 1)
    y = d * scale + beta                                  # pad cols -> beta (sliced off)
    o_ref[0] = y.astype(o_ref.dtype)


def _stats_kernel(x_ref, sum_ref, sq_ref):
    """Fallback pass 1: streaming per-sample sum / sum-of-squares."""
    @pl.when(pl.program_id(1) == 0)
    def _():
        sum_ref[...] = jnp.zeros_like(sum_ref)
        sq_ref[...] = jnp.zeros_like(sq_ref)

    xf = x_ref[...].astype(jnp.float32)                   # (1, C, T); pad = 0
    sum_ref[...] += jnp.sum(xf, axis=(1, 2), keepdims=True)
    sq_ref[...] += jnp.sum(xf * xf, axis=(1, 2), keepdims=True)


def _apply_kernel(scale_ref, shift_ref, x_ref, o_ref):
    """Fallback pass 2: out = x * scale + shift (scale/shift fold everything)."""
    xf = x_ref[...].astype(jnp.float32)                   # (1, C, T)
    y = xf * scale_ref[...] + shift_ref[...]              # (1, C, 1) broadcasts
    o_ref[...] = y.astype(o_ref.dtype)


# ---------------------------------------------------------------------------
# Wrapper
# ---------------------------------------------------------------------------
def _round_up(v, m):
    return (v + m - 1) // m * m


def _vmem_capacity_bytes():
    """Generation-aware VMEM capacity; conservative fallback = v7x (64 MiB)."""
    try:
        info = pltpu.get_tpu_info()
        cap = getattr(info, "vmem_capacity_bytes", None)
        if cap:
            return int(cap)
    except Exception:
        pass
    return 64 * 1024 * 1024


def layer_norm(x, gamma=None, beta=None, eps=1e-5,
               max_fused_bytes=None, tile_lanes=None):
    orig_shape = x.shape
    N, C = x.shape[0], x.shape[1]
    HW = 1
    for d in x.shape[2:]:
        HW *= d
    M = C * HW
    itemsize = jnp.dtype(x.dtype).itemsize
    xr = x.reshape(N, C, HW)

    if gamma is None:
        gamma = jnp.ones((C,), jnp.float32)
    if beta is None:
        beta = jnp.zeros((C,), jnp.float32)
    g32 = gamma.astype(jnp.float32).reshape(1, C, 1)
    b32 = beta.astype(jnp.float32).reshape(1, C, 1)

    cap = _vmem_capacity_bytes()
    vmem_limit = min(int(cap * 0.8), 100 * 1024 * 1024)
    budget = vmem_limit // 2                               # headroom for pipeline

    rows = _round_up(C, 8)                                 # sublane-padded rows
    hwp_fused = _round_up(HW, 128)
    # double-buffered native in + out, plus ~2x f32 working copies per block
    fused_need = rows * hwp_fused * (4 * itemsize + 8)
    fuse_threshold = budget if max_fused_bytes is None else max_fused_bytes

    # -------------------- fused single-pass path --------------------
    if fused_need <= fuse_threshold:
        HWp = hwp_fused
        xp = xr if HWp == HW else jnp.pad(xr, ((0, 0), (0, 0), (0, HWp - HW)))
        x_spec = pl.BlockSpec((1, C, HWp), lambda n: (n, 0, 0))
        p_spec = pl.BlockSpec((1, C, 1), lambda n: (0, 0, 0))   # resident params

        out = pl.pallas_call(
            functools.partial(_fused_kernel, hw=HW, m=M, eps=eps),
            out_shape=jax.ShapeDtypeStruct((N, C, HWp), x.dtype),
            grid=(N,),
            in_specs=[p_spec, p_spec, x_spec],
            out_specs=x_spec,
            compiler_params=pltpu.CompilerParams(
                dimension_semantics=("parallel",),
                vmem_limit_bytes=vmem_limit),
            cost_estimate=pl.CostEstimate(
                flops=6 * N * C * HWp,
                transcendentals=N,
                bytes_accessed=2 * N * C * HWp * itemsize),
        )(g32, b32, xp)
        if HWp != HW:
            out = out[:, :, :HW]
        return out.reshape(orig_shape)

    # -------------------- fallback streaming two-pass path --------------------
    # Byte-based tile size: (2 in + 2 out double-buffered) native + f32 temps.
    per_lane = rows * (4 * itemsize + 8)
    t_max = max(128, (budget // per_lane) // 128 * 128)
    T = min(t_max, 8192, _round_up(HW, 128))
    if tile_lanes is not None:
        T = max(128, (tile_lanes // 128) * 128)
    HWp = _round_up(HW, T)
    nt = HWp // T
    xp = xr if HWp == HW else jnp.pad(xr, ((0, 0), (0, 0), (0, HWp - HW)))

    x_spec = pl.BlockSpec((1, C, T), lambda n, t: (n, 0, t))
    stat_spec = pl.BlockSpec((1, 1, 1), lambda n, t: (n, 0, 0))

    # pass 1: per-sample sum / sum-of-squares (zero padding contributes 0)
    s, ss = pl.pallas_call(
        _stats_kernel,
        out_shape=(
            jax.ShapeDtypeStruct((N, 1, 1), jnp.float32),
            jax.ShapeDtypeStruct((N, 1, 1), jnp.float32),
        ),
        grid=(N, nt),
        in_specs=[x_spec],
        out_specs=(stat_spec, stat_spec),
        compiler_params=pltpu.CompilerParams(
            dimension_semantics=("parallel", "arbitrary"),
            vmem_limit_bytes=vmem_limit),
        cost_estimate=pl.CostEstimate(
            flops=3 * N * C * HWp,
            transcendentals=0,
            bytes_accessed=N * C * HWp * itemsize),
    )(xp)

    # tiny per-sample finalize (a few scalars per batch element)
    mean = s / M                                           # (N,1,1)
    # TODO(synk): E[x^2]-mean^2 can cancel for huge M with large |mean|; the
    # fused path above uses sum((x-mean)^2) and is preferred whenever it fits.
    var = jnp.maximum(ss - M * mean * mean, 0.0) / max(M - 1, 1)
    inv = 1.0 / (jnp.sqrt(var) + eps)                      # unbiased std + eps
    scale = g32 * inv                                      # (N, C, 1)
    shift = b32 - scale * mean                             # (N, C, 1)

    param_spec = pl.BlockSpec((1, C, 1), lambda n, t: (n, 0, 0))

    # pass 2: fused normalize + affine, fully parallel stream
    out = pl.pallas_call(
        _apply_kernel,
        out_shape=jax.ShapeDtypeStruct((N, C, HWp), x.dtype),
        grid=(N, nt),
        in_specs=[param_spec, param_spec, x_spec],
        out_specs=x_spec,
        compiler_params=pltpu.CompilerParams(
            dimension_semantics=("parallel", "parallel"),
            vmem_limit_bytes=vmem_limit),
        cost_estimate=pl.CostEstimate(
            flops=2 * N * C * HWp,
            transcendentals=0,
            bytes_accessed=2 * N * C * HWp * itemsize),
    )(scale, shift, xp)
    if HWp != HW:
        out = out[:, :, :HW]
    return out.reshape(orig_shape)


# ---------------------------------------------------------------------------
# Reference + test
# ---------------------------------------------------------------------------
def _reference(x, gamma, beta, eps=1e-5):
    # Pure-JAX transcription of the PyTorch forward.
    N, C = x.shape[0], x.shape[1]
    xf = x.reshape(N, -1).astype(jnp.float32)
    mean = jnp.mean(xf, axis=1)
    std = jnp.std(xf, axis=1, ddof=1)                      # torch.std: unbiased
    bshape = (N,) + (1,) * (x.ndim - 1)
    y = (x.astype(jnp.float32) - mean.reshape(bshape)) / (std.reshape(bshape) + eps)
    pshape = (1, C) + (1,) * (x.ndim - 2)
    y = gamma.reshape(pshape) * y + beta.reshape(pshape)
    return y.astype(x.dtype)


if __name__ == "__main__":
    key = jax.random.PRNGKey(0)
    kx, kg, kx2, kg2 = jax.random.split(key, 4)

    # Shape implied by the module usage: NCHW conv feature maps.
    N, C, H, W = 2, 4, 16, 16
    X = jax.random.normal(kx, (N, C, H, W), dtype=jnp.float32)
    gamma = jax.random.uniform(kg, (C,), dtype=jnp.float32)   # matches uniform_() init
    beta = jnp.zeros((C,), jnp.float32)                       # matches zeros init

    ref = jax.block_until_ready(_reference(X, gamma, beta))

    # Fused single-pass path (default for shapes that fit VMEM).
    out = jax.block_until_ready(layer_norm(X, gamma, beta))
    assert out.shape == (N, C, H, W)
    assert jnp.allclose(out, ref, rtol=1e-3, atol=1e-3)

    # Force the streaming two-pass fallback, with 128-lane tiles to exercise
    # the accumulating reduction axis and resident per-batch params.
    out_tiled = jax.block_until_ready(
        layer_norm(X, gamma, beta, max_fused_bytes=0, tile_lanes=128))
    assert jnp.allclose(out_tiled, ref, rtol=1e-3, atol=1e-3)

    # Non-multiple-of-128 spatial + small C: exercises HW padding/masking on
    # both paths.
    X2 = jax.random.normal(kx2, (2, 3, 10, 10), dtype=jnp.float32)
    g2 = jax.random.uniform(kg2, (3,), dtype=jnp.float32)
    b2 = jnp.zeros((3,), jnp.float32)
    ref2 = jax.block_until_ready(_reference(X2, g2, b2))
    out2 = jax.block_until_ready(layer_norm(X2, g2, b2))
    assert jnp.allclose(out2, ref2, rtol=1e-3, atol=1e-3)
    out2_tiled = jax.block_until_ready(layer_norm(X2, g2, b2, max_fused_bytes=0))
    assert jnp.allclose(out2_tiled, ref2, rtol=1e-3, atol=1e-3)

    print("KERNEL_OK")
</pallas_src>

<mosaic_0001>
module attributes {stable_mosaic.version = 11 : i64} {
  func.func @_fused_kernel(%arg0: i32, %arg1: memref<1x4x1xf32, #tpu.memory_space<vmem>>, %arg2: memref<1x4x1xf32, #tpu.memory_space<vmem>>, %arg3: memref<1x4x256xf32, #tpu.memory_space<vmem>>, %arg4: memref<1x4x256xf32, #tpu.memory_space<vmem>>) attributes {dimension_semantics = [#tpu.dimension_semantics<parallel>], iteration_bounds = array<i64: 2>, scalar_prefetch = 0 : i64, scratch_operands = 0 : i64, tpu.core_type = #tpu.core_type<tc>, window_params = [{pipeline_mode = #tpu.pipeline_mode<synchronous>, transform_indices = @transform_0, window_bounds = array<i64: 1, 4, 1>}, {pipeline_mode = #tpu.pipeline_mode<synchronous>, transform_indices = @transform_1, window_bounds = array<i64: 1, 4, 1>}, {transform_indices = @transform_2, window_bounds = array<i64: 1, 4, 256>}, {transform_indices = @transform_3, window_bounds = array<i64: 1, 4, 256>}]} {
    %c0 = arith.constant 0 : index
    %c0_0 = arith.constant 0 : index
    %c0_1 = arith.constant 0 : index
    %0 = vector.load %arg3[%c0, %c0_0, %c0_1] : memref<1x4x256xf32, #tpu.memory_space<vmem>>, vector<1x4x256xf32>
    %1 = vector.shape_cast %0 : vector<1x4x256xf32> to vector<4x256xf32>
    %2 = vector.shape_cast %1 : vector<4x256xf32> to vector<1x4x256xf32>
    %cst = arith.constant dense<0.000000e+00> : vector<1xf32>
    %3 = vector.multi_reduction <add>, %2, %cst [1, 2] : vector<1x4x256xf32> to vector<1xf32>
    %4 = vector.shape_cast %3 : vector<1xf32> to vector<1x1x1xf32>
    %5 = vector.extract %4[0, 0, 0] : f32 from vector<1x1x1xf32>
    %cst_2 = arith.constant 1.024000e+03 : f32
    %6 = arith.divf %5, %cst_2 : f32
    %7 = vector.broadcast %6 : f32 to vector<4x256xf32>
    %8 = arith.subf %1, %7 : vector<4x256xf32>
    %9 = arith.mulf %8, %8 : vector<4x256xf32>
    %10 = vector.shape_cast %9 : vector<4x256xf32> to vector<1x4x256xf32>
    %cst_3 = arith.constant dense<0.000000e+00> : vector<1xf32>
    %11 = vector.multi_reduction <add>, %10, %cst_3 [1, 2] : vector<1x4x256xf32> to vector<1xf32>
    %12 = vector.shape_cast %11 : vector<1xf32> to vector<1x1x1xf32>
    %13 = vector.extract %12[0, 0, 0] : f32 from vector<1x1x1xf32>
    %cst_4 = arith.constant 1.023000e+03 : f32
    %14 = arith.divf %13, %cst_4 : f32
    %15 = math.sqrt %14 : f32
    %cst_5 = arith.constant 9.99999974E-6 : f32
    %16 = arith.addf %15, %cst_5 : f32
    %cst_6 = arith.constant 1.000000e+00 : f32
    %17 = arith.divf %cst_6, %16 : f32
    %c0_7 = arith.constant 0 : index
    %c0_8 = arith.constant 0 : index
    %c0_9 = arith.constant 0 : index
    %18 = vector.load %arg1[%c0_7, %c0_8, %c0_9] : memref<1x4x1xf32, #tpu.memory_space<vmem>>, vector<1x4x1xf32>
    %19 = vector.shape_cast %18 : vector<1x4x1xf32> to vector<4x1xf32>
    %20 = vector.broadcast %17 : f32 to vector<4x1xf32>
    %21 = arith.mulf %19, %20 : vector<4x1xf32>
    %c0_10 = arith.constant 0 : index
    %c0_11 = arith.constant 0 : index
    %c0_12 = arith.constant 0 : index
    %22 = vector.load %arg2[%c0_10, %c0_11, %c0_12] : memref<1x4x1xf32, #tpu.memory_space<vmem>>, vector<1x4x1xf32>
    %23 = vector.shape_cast %22 : vector<1x4x1xf32> to vector<4x1xf32>
    %24 = vector.broadcast %21 : vector<4x1xf32> to vector<4x256xf32>
    %25 = arith.mulf %8, %24 : vector<4x256xf32>
    %26 = vector.broadcast %23 : vector<4x1xf32> to vector<4x256xf32>
    %27 = arith.addf %25, %26 : vector<4x256xf32>
    %c0_13 = arith.constant 0 : index
    %c0_14 = arith.constant 0 : index
    %c0_15 = arith.constant 0 : index
    %28 = vector.load %arg4[%c0_13, %c0_14, %c0_15] : memref<1x4x256xf32, #tpu.memory_space<vmem>>, vector<1x4x256xf32>
    %29 = vector.shape_cast %28 : vector<1x4x256xf32> to vector<4x256xf32>
    %30 = vector.shape_cast %27 : vector<4x256xf32> to vector<1x4x256xf32>
    tpu.vector_store %arg4[%c0_13, %c0_14, %c0_15], %30 {strides = array<i32>} : memref<1x4x256xf32, #tpu.memory_space<vmem>>, vector<1x4x256xf32>,
    return
  }
  func.func @transform_0(%arg0: i32) -> (i32, i32, i32) {
    %c0_i32 = arith.constant 0 : i32
    %c0_i32_0 = arith.constant 0 : i32
    %c0_i32_1 = arith.constant 0 : i32
    %c0_i32_2 = arith.constant 0 : i32
    return %c0_i32, %c0_i32_0, %c0_i32_1 : i32, i32, i32
  }
  func.func @transform_1(%arg0: i32) -> (i32, i32, i32) {
    %c0_i32 = arith.constant 0 : i32
    %c0_i32_0 = arith.constant 0 : i32
    %c0_i32_1 = arith.constant 0 : i32
    %c0_i32_2 = arith.constant 0 : i32
    return %c0_i32, %c0_i32_0, %c0_i32_1 : i32, i32, i32
  }
  func.func @transform_2(%arg0: i32) -> (i32, i32, i32) {
    %c0_i32 = arith.constant 0 : i32
    %c0_i32_0 = arith.constant 0 : i32
    %c0_i32_1 = arith.constant 0 : i32
    return %arg0, %c0_i32, %c0_i32_0 : i32, i32, i32
  }
  func.func @transform_3(%arg0: i32) -> (i32, i32, i32) {
    %c0_i32 = arith.constant 0 : i32
    %c0_i32_0 = arith.constant 0 : i32
    %c0_i32_1 = arith.constant 0 : i32
    return %arg0, %c0_i32, %c0_i32_0 : i32, i32, i32
  }
}

</mosaic_0001>

<llo_original>
// kernel: tpu_custom_call.1
$region0: #{tpu_custom_call.1}
  #allocation0 [shape = 'u32[]', space=smem, size = 0x4, offset = 0x4, fixed_abs, tag = 'smem constant byte address 0x4 - core index']
  #allocation1 [shape = 'u32[144,128]{1,0:T(1,128)}', space=vmem, size = 0x12000, scoped, tag = 'internal scratch']
  %s0 = inlined_call_operand.vmem [shape: f32[1,4,1], index: 0, kind: input, shape index: {}]
  %s1 = inlined_call_operand.vmem [shape: f32[1,4,1], index: 1, kind: input, shape index: {}]
  %s2 = inlined_call_operand.vmem [shape: f32[2,4,256], index: 2, kind: input, shape index: {}]
  %s3 = inlined_call_operand.hbm [shape: f32[2,4,256], index: 3, kind: output, shape index: {}]
  %s4 = sld [smem:[#allocation0]]
  $region45: #{tpu_custom_call.1} parent=0
    _
  %s6 = ssub.s32 1, %s4
  %s7 = scalar_select 0, %s6, %s4
  $region1: #{tpu_custom_call.1} parent=0
    #allocation2 [shape = 'u8[8192]{0}', space=vmem, size = 0x2000, scoped, tag = 'output window, operand 0']
    #allocation3 [shape = 's32[2]{0}', space=sflag, size = 0x8, scoped, tag = 'scoped memory for tpu_custom_call.1']
    %8 = vsyncpa [#allocation3], 0
    %s9 = scalar_lea.sflag [#allocation3], 1
    %10 = vsyncpa %s9, 0
    loop: start=0, step=1, limit=4
    $region2: #{tpu_custom_call.1} parent=1 // loop_pre_header
      _
    $region3: #{tpu_custom_call.1} parent=1 // loop_header
      %s12 = sphi 0, %s16
      %p13 = scmp.ge.s32.totalorder %s12, 4
      %s20 = sphi 0, %s20
      %s22 = sphi 0, %s20
      %s23 = sphi 0, %s22
      %s37 = sphi 0, %s23
      %s41 = sphi 0, %s41
      %s43 = sphi 0, %s41
      %s44 = sphi 0, %s43
      %s58 = sphi 0, %s44
      %s64 = sphi 0, %s66
      %s67 = sphi 0, %s64
      %s68 = sphi 0, %s67
      %s84 = sphi 0, %s68
      %s90 = sphi 0, %s92
      %s93 = sphi 0, %s90
      %s94 = sphi 0, %s93
      %s110 = sphi 0, %s94
    $region4: #{tpu_custom_call.1} parent=1 // loop_header_branch
      %15 = sbr.rel (%p13) target = $region8
    $region5: #{tpu_custom_call.1} parent=1 // loop_body
      %s17 = ssub.s32 %s12, 1
      %s18 = ssub.s32 %s12, 2
      %s19 = sadd.s32 %s12, 1
      %s21 = sadd.s32 %s20, 1
      %p24 = scmp.eq.s32.totalorder %s12, 1
      %p25 = scmp.ne.s32.totalorder %s20, %s22
      %p26 = scmp.eq.s32.totalorder %s12, 0
      %p27 = por %p25, %p26
      %p28 = scmp.ne.s32.totalorder %s20, %s22
      %p29 = scmp.eq.s32.totalorder %s17, 1
      %p30 = por %p28, %p29
      %p31 = scmp.ne.s32.totalorder %s22, %s23
      %p32 = scmp.eq.s32.totalorder %s17, 0
      %p33 = por %p31, %p32
      %p34 = scmp.ne.s32.totalorder %s22, %s23
      %p35 = scmp.eq.s32.totalorder %s18, 1
      %p36 = por %p34, %p35
      %p38 = scmp.ne.s32.totalorder %s23, %s37
      %p39 = scmp.eq.s32.totalorder %s18, 0
      %p40 = por %p38, %p39
      %s42 = sadd.s32 %s41, 1
      %p45 = scmp.eq.s32.totalorder %s12, 1
      %p46 = scmp.ne.s32.totalorder %s41, %s43
      %p47 = scmp.eq.s32.totalorder %s12, 0
      %p48 = por %p46, %p47
      %p49 = scmp.ne.s32.totalorder %s41, %s43
      %p50 = scmp.eq.s32.totalorder %s17, 1
      %p51 = por %p49, %p50
      %p52 = scmp.ne.s32.totalorder %s43, %s44
      %p53 = scmp.eq.s32.totalorder %s17, 0
      %p54 = por %p52, %p53
      %p55 = scmp.ne.s32.totalorder %s43, %s44
      %p56 = scmp.eq.s32.totalorder %s18, 1
      %p57 = por %p55, %p56
      %p59 = scmp.ne.s32.totalorder %s44, %s58
      %p60 = scmp.eq.s32.totalorder %s18, 0
      %p61 = por %p59, %p60
      %s62 = ssub.s32 %s12, %s19
      %p63 = scmp.eq.s32.totalorder %s62, 0
      %s65 = sadd.s32 %s64, 1
      %s66 = scalar_select %p63, %s64, %s65
      %p69 = pneg %p63
      %p70 = scmp.eq.s32.totalorder %s12, 1
      %p71 = por %p69, %p70
      %p72 = scmp.ne.s32.totalorder %s64, %s67
      %p73 = scmp.eq.s32.totalorder %s12, 0
      %p74 = por %p72, %p73
      %p75 = scmp.ne.s32.totalorder %s64, %s67
      %p76 = scmp.eq.s32.totalorder %s17, 1
      %p77 = por %p75, %p76
      %p78 = scmp.ne.s32.totalorder %s67, %s68
      %p79 = scmp.eq.s32.totalorder %s17, 0
      %p80 = por %p78, %p79
      %p81 = scmp.ne.s32.totalorder %s67, %s68
      %p82 = scmp.eq.s32.totalorder %s18, 1
      %p83 = por %p81, %p82
      %p85 = scmp.ne.s32.totalorder %s68, %s84
      %p86 = scmp.eq.s32.totalorder %s18, 0
      %p87 = por %p85, %p86
      %s88 = ssub.s32 %s12, %s19
      %p89 = scmp.eq.s32.totalorder %s88, 0
      %s91 = sadd.s32 %s90, 1
      %s92 = scalar_select %p89, %s90, %s91
      %p95 = pneg %p89
      %p96 = scmp.eq.s32.totalorder %s12, 1
      %p97 = por %p95, %p96
      %p98 = scmp.ne.s32.totalorder %s90, %s93
      %p99 = scmp.eq.s32.totalorder %s12, 0
      %p100 = por %p98, %p99
      %p101 = scmp.ne.s32.totalorder %s90, %s93
      %p102 = scmp.eq.s32.totalorder %s17, 1
      %p103 = por %p101, %p102
      %p104 = scmp.ne.s32.totalorder %s93, %s94
      %p105 = scmp.eq.s32.totalorder %s17, 0
      %p106 = por %p104, %p105
      %p107 = scmp.ne.s32.totalorder %s93, %s94
      %p108 = scmp.eq.s32.totalorder %s18, 1
      %p109 = por %p107, %p108
      %p111 = scmp.ne.s32.totalorder %s94, %s110
      %p112 = scmp.eq.s32.totalorder %s18, 0
      %p113 = por %p111, %p112
      %p114 = scmp.le.s32.totalorder 1, %s12
      %p115 = scmp.lt.s32.totalorder %s12, 3
      %p116 = pnand %p114, %p115
      %p117 = pneg %p116
      // Predicated region
      $region9: #{tpu_custom_call.1} parent=5 // pred_check
        _
      $region10: #{tpu_custom_call.1} parent=5 // pred_check_branch
        %119 = sbr.rel (%p116) target = $region12
      $region11: #{tpu_custom_call.1} parent=5 // pred_region
        %s120 = ssub.s32 %s12, 1
        // Predicated region
        $region13: #{tpu_custom_call.1} parent=11 // pred_check
          %p121 = pneg %p33
        $region14: #{tpu_custom_call.1} parent=11 // pred_check_branch
          %123 = sbr.rel (%p121) target = $region16
        $region15: #{tpu_custom_call.1} parent=11 // pred_region
          _
        $region16: #{tpu_custom_call.1} parent=11 // pred_fallthru
          _
        // Predicated region
        $region17: #{tpu_custom_call.1} parent=11 // pred_check
          %p124 = pneg %p54
        $region18: #{tpu_custom_call.1} parent=11 // pred_check_branch
          %126 = sbr.rel (%p124) target = $region20
        $region19: #{tpu_custom_call.1} parent=11 // pred_region
          _
        $region20: #{tpu_custom_call.1} parent=11 // pred_fallthru
          _
      $region12: #{tpu_custom_call.1} parent=5 // pred_fallthru
        _
      %p127 = scmp.lt.s32.totalorder %s12, 2
      // Predicated region
      $region21: #{tpu_custom_call.1} parent=5 // pred_check
        %p128 = pneg %p127
      $region22: #{tpu_custom_call.1} parent=5 // pred_check_branch
        %130 = sbr.rel (%p128) target = $region24
      $region23: #{tpu_custom_call.1} parent=5 // pred_region
        // Predicated region
        $region25: #{tpu_custom_call.1} parent=23 // pred_check
          %p131 = pneg %p74
        $region26: #{tpu_custom_call.1} parent=23 // pred_check_branch
          %133 = sbr.rel (%p131) target = $region28
        $region27: #{tpu_custom_call.1} parent=23 // pred_region
          %p134 = scmp.lt.s32.totalorder %s12, 1
          %s135 = scalar_select %p134, %s12, 1
          %s136 = smul.addr %s135, 2
          %s137 = smul.addr %s136, 4
          %s138 = scalar_lea.vmem %s2, %s137
        $region28: #{tpu_custom_call.1} parent=23 // pred_fallthru
          _
      $region24: #{tpu_custom_call.1} parent=5 // pred_fallthru
        _
      %p139 = scmp.le.s32.totalorder 1, %s12
      %p140 = scmp.lt.s32.totalorder %s12, 3
      %p141 = pnand %p139, %p140
      %p142 = pneg %p141
      // Predicated region
      $region29: #{tpu_custom_call.1} parent=5 // pred_check
        _
      $region30: #{tpu_custom_call.1} parent=5 // pred_check_branch
        %144 = sbr.rel (%p141) target = $region32
      $region31: #{tpu_custom_call.1} parent=5 // pred_region
        %s145 = ssub.s32 %s12, 1
        %p146 = pneg %p33
        %p147 = pneg %p30
        %p148 = pneg %p54
        %p149 = pneg %p51
        %p150 = scmp.lt.s32.totalorder %s17, 1
        %s151 = scalar_select %p150, %s17, 1
        %s152 = smul.addr %s151, 2
        %s153 = smul.addr %s152, 4
        %s154 = scalar_lea.vmem %s2, %s153
        %p155 = pneg %p80
        %p156 = pneg %p77
        %p157 = pneg %p106
        %p158 = pneg %p103
        %s159 = sand.u32 %s93, 1
        %s160 = scalar_lea.sflag [#allocation3], %s159
        %s161 = sand.u32 %s93, 1
        %s162 = smul.addr %s161, 8
        %s163 = scalar_lea.vmem [#allocation2], %s162
        %p164 = scmp.lt.s32.totalorder %s17, 1
        %s165 = scalar_select %p164, %s17, 1
        %s166 = smul.addr %s165, 2
        %s167 = smul.addr %s166, 4
        %s168 = scalar_lea.vmem %s2, %s167
        %v169 = vld [vmem:[%s168] sm:$0xff]
        %v171 = vcombine.high %v169, %v169
        %vm173 = vcmask 1043456
        %v174 = vsel %vm173, %v169, 0.0
        %v175 = vsel %vm173, %v171, 0.0
        %v176 = vadd.f32 %v174, %v175
        %177 = vadd.xlane.f32.xlu0 %v176
        %v178 = vpop.xlane.xlu0 %177
        %v179 = vrot.slane %v178, 4
        %v180 = vadd.f32 %v178, %v179
        %v181 = vrot.slane %v180, 2
        %v182 = vadd.f32 %v180, %v181
        %v183 = vrot.slane %v182, 1
        %v184 = vadd.f32 %v182, %v183
        %s185 = vtos %v184
        %v186 = vrcp.pop 1024.0
        %s187 = vtos %v186
        %s188 = smul.f32 %s185, %s187
        %v189 = vstv %s188
        %v190 = vsub.f32 %v169, %v189
        %v191 = vmul.f32 %v190, %v190
        %v193 = vcombine.high %v191, %v191
        %v195 = vsel %vm173, %v191, 0.0
        %v196 = vsel %vm173, %v193, 0.0
        %v197 = vadd.f32 %v195, %v196
        %198 = vadd.xlane.f32.xlu0 %v197
        %v199 = vpop.xlane.xlu0 %198
        %v200 = vrot.slane %v199, 4
        %v201 = vadd.f32 %v199, %v200
        %v202 = vrot.slane %v201, 2
        %v203 = vadd.f32 %v201, %v202
        %v204 = vrot.slane %v203, 1
        %v205 = vadd.f32 %v203, %v204
        %s206 = vtos %v205
        %v207 = vrcp.pop 1023.0
        %s208 = vtos %v207
        %s209 = smul.f32 %s206, %s208
        %v210 = vstv %s209
        %v211 = vrsqrt.pop %v210
        %v212 = vmul.f32 %v210, %v211
        %vm213 = vcmp.eq.f32.partialorder %v210, inf
        %v214 = vsel %vm213, %v210, %v212
        %vm215 = vcmp.eq.f32.partialorder %v210, 0.0
        %v216 = vand.u32 %v210, 2147483648
        %v217 = vsel %vm215, %v216, %v214
        %s218 = vtos %v217
        %s219 = sadd.f32 %s218, 1e-05
        %v220 = vstv %s219
        %v221 = vrcp.pop %v220
        %s222 = vtos %v221
        %v223 = vld [vmem:[%s0] sm:$0xf]
        %v224 = vstv %s222
        %v225 = vmul.f32 %v223, %v224
        %v226 = vld [vmem:[%s1] sm:$0xf]
        %228 = vset.pattern.permute.xlu0 0
        %229 = vperm.xlu0 %228, %v225
        %v230 = vpop.permute.xlu0 %229
        %v232 = vunpack.c.l.s4 839922192
        %v233 = vunpack.c.0.s8 %v232
        %v234 = vlaneseq
        %v235 = vshrl.u32 %v234, 7
        %v236 = vsub.s32 %v233, %v235
        %v237 = vrot.slane %v230, %v236
        %v239 = vmul.f32 %v190, %v237
        %241 = vset.pattern.permute.xlu0 0
        %242 = vperm.xlu0 %241, %v226
        %v243 = vpop.permute.xlu0 %242
        %v245 = vunpack.c.l.s4 839922192
        %v246 = vunpack.c.0.s8 %v245
        %v247 = vlaneseq
        %v248 = vshrl.u32 %v247, 7
        %v249 = vsub.s32 %v246, %v248
        %v250 = vrot.slane %v243, %v249
        %v252 = vadd.f32 %v239, %v250
        %253 = vst [vmem:[%s163] sm:$0xff] %v252
        %s254 = sand.u32 %s93, 1
        %s255 = scalar_lea.sflag [#allocation3], %s254
        %s256 = sand.u32 %s93, 1
        %s257 = smul.addr %s256, 8
        %s258 = scalar_lea.vmem [#allocation2], %s257
        // Predicated region
        $region33: #{tpu_custom_call.1} parent=31 // pred_check
          %p259 = pneg %p103
        $region34: #{tpu_custom_call.1} parent=31 // pred_check_branch
          %261 = sbr.rel (%p259) target = $region36
        $region35: #{tpu_custom_call.1} parent=31 // pred_region
          %s263 = ssub.s32 128, 128
          %264 = vsyncadd %s255, %s263
          %s265 = smul.addr %s17, 2
          %s266 = smul.addr %s265, 64
          %s267 = scalar_lea.hbm %s3, %s266
          %s269 = sshll.u32 %s258, 4
          %s270 = int_to_ptr.vmem [resolvable:$true] %s269
          %272 = dma.vmem_to_hbm [thread:$0]  %s270, 128, %s267, %s255
        $region36: #{tpu_custom_call.1} parent=31 // pred_fallthru
          _
      $region32: #{tpu_custom_call.1} parent=5 // pred_fallthru
        _
      %p273 = scmp.le.s32.totalorder 2, %s12
      // Predicated region
      $region37: #{tpu_custom_call.1} parent=5 // pred_check
        %p274 = pneg %p273
      $region38: #{tpu_custom_call.1} parent=5 // pred_check_branch
        %276 = sbr.rel (%p274) target = $region40
      $region39: #{tpu_custom_call.1} parent=5 // pred_region
        %s277 = ssub.s32 %s12, 2
        // Predicated region
        $region41: #{tpu_custom_call.1} parent=39 // pred_check
          %p278 = pneg %p109
        $region42: #{tpu_custom_call.1} parent=39 // pred_check_branch
          %280 = sbr.rel (%p278) target = $region44
        $region43: #{tpu_custom_call.1} parent=39 // pred_region
          %s281 = sand.u32 %s94, 1
          %s282 = scalar_lea.sflag [#allocation3], %s281
          %s283 = sand.u32 %s94, 1
          %s284 = smul.addr %s283, 8
          %s285 = scalar_lea.vmem [#allocation2], %s284
          %286 = dma.done %s282, 128
        $region44: #{tpu_custom_call.1} parent=39 // pred_fallthru
          _
      $region40: #{tpu_custom_call.1} parent=5 // pred_fallthru
        _
    $region6: #{tpu_custom_call.1} parent=1 // loop_footer
      %s16 = sadd.s32 1, %s12
    $region7: #{tpu_custom_call.1} parent=1 // loop_footer_branch
      %11 = sbr.rel target = $region3
    $region8: #{tpu_custom_call.1} parent=1 // loop_exit
      _
    %287 = vsyncpa [#allocation3], 1
    %s288 = scalar_lea.sflag [#allocation3], 1
    %289 = vsyncpa %s288, 1

</llo_original>
